<compile_context>
chip_gen: v6e
topology: v6e:2x2x1
jax: 0.10.0
libtpu: 0.0.40
codegen_flags: <defaults>
</compile_context>

<pallas_src>
import functools

import jax
import jax.numpy as jnp
from jax.experimental import pallas as pl
from jax.experimental.pallas import tpu as pltpu


def _ce_label_smooth_kernel(x_ref, t_ref, out_ref, *, epsilon, num_classes,
                            batch, tile_b):
    # x_ref : (TB, C) logits tile in VMEM (input dtype, upcast here)
    # t_ref : (TB, 1) int32 labels tile in VMEM
    # out_ref: (1, 1) float32 partial loss sum for this tile (SMEM)
    i = pl.program_id(0)

    x = x_ref[...].astype(jnp.float32)                 # (TB, C)
    t = t_ref[...]                                     # (TB, 1) int32

    # Fused, numerically-stable per-row loss (no one_hot / smoothed temporaries).
    m = jnp.max(x, axis=1, keepdims=True)              # (TB, 1)
    lse = jnp.log(jnp.sum(jnp.exp(x - m), axis=1, keepdims=True))
    logZ = m + lse                                     # (TB, 1) = logsumexp(x)
    s = jnp.sum(x, axis=1, keepdims=True)              # (TB, 1)

    class_ids = jax.lax.broadcasted_iota(jnp.int32, x.shape, 1)
    x_t = jnp.sum(jnp.where(class_ids == t, x, 0.0), axis=1, keepdims=True)

    c = float(num_classes)
    row_loss = (1.0 - epsilon) * (logZ - x_t) + (epsilon / c) * (c * logZ - s)

    # Mask rows past the true batch size (last partial tile holds stale data).
    row_ids = jax.lax.broadcasted_iota(jnp.int32, row_loss.shape, 0)
    valid = (row_ids + i * tile_b) < batch
    row_loss = jnp.where(valid, row_loss, 0.0)

    out_ref[0, 0] = jnp.sum(row_loss)


def cross_entropy_label_smooth(inputs, targets, num_classes, epsilon=0.1,
                               tile_b=None):
    """inputs: (B, C) logits, targets: (B,) int labels -> scalar f32 loss."""
    B, C = inputs.shape
    assert C == num_classes

    if tile_b is None:
        # Size the batch tile from a per-buffer VMEM budget (double-buffered by
        # the pipeline); conservative enough for v7x's 64 MiB VMEM.
        bytes_per_row = C * jnp.dtype(inputs.dtype).itemsize
        budget = 8 * 1024 * 1024                      # per input buffer
        tile_b = max(8, min(512, budget // max(1, bytes_per_row)))
        tile_b = max(8, (tile_b // 8) * 8)            # multiple of 8 sublanes
        tile_b = min(tile_b, ((B + 7) // 8) * 8)      # don't exceed (padded) B

    num_tiles = pl.cdiv(B, tile_b)
    targets2d = targets.astype(jnp.int32).reshape(B, 1)

    kernel = functools.partial(
        _ce_label_smooth_kernel,
        epsilon=float(epsilon),
        num_classes=int(num_classes),
        batch=int(B),
        tile_b=int(tile_b),
    )

    partials = pl.pallas_call(
        kernel,
        out_shape=jax.ShapeDtypeStruct((num_tiles, 1), jnp.float32),
        grid=(num_tiles,),
        in_specs=[
            pl.BlockSpec((tile_b, C), lambda i: (i, 0)),
            pl.BlockSpec((tile_b, 1), lambda i: (i, 0)),
        ],
        out_specs=pl.BlockSpec((1, 1), lambda i: (i, 0),
                               memory_space=pltpu.SMEM),
        compiler_params=pltpu.CompilerParams(
            dimension_semantics=("parallel",),
            vmem_limit_bytes=48 * 1024 * 1024,
        ),
    )(inputs, targets2d)

    # Finalize: mean over the batch, sum over classes == sum(partials) / B.
    return jnp.sum(partials) / B


def _reference(inputs, targets, num_classes, epsilon=0.1):
    log_probs = jax.nn.log_softmax(inputs.astype(jnp.float32), axis=1)
    one_hot = jax.nn.one_hot(targets, num_classes, dtype=jnp.float32)
    smoothed = (1.0 - epsilon) * one_hot + epsilon / num_classes
    return jnp.sum(jnp.mean(-smoothed * log_probs, axis=0))


if __name__ == "__main__":
    key = jax.random.PRNGKey(0)

    # Case 1: small shape matching the module's toy config (B=8, C=16).
    batch, num_classes = 8, 16
    k1, k2 = jax.random.split(key)
    logits = jax.random.normal(k1, (batch, num_classes), dtype=jnp.float32)
    labels = jax.random.randint(k2, (batch,), 0, num_classes, dtype=jnp.int32)

    loss = cross_entropy_label_smooth(logits, labels, num_classes, epsilon=0.1)
    loss = jax.block_until_ready(loss)
    ref = _reference(logits, labels, num_classes, epsilon=0.1)
    assert jnp.allclose(loss, ref, atol=1e-5, rtol=1e-5), (loss, ref)

    # Case 2: multi-tile grid with a partial last tile (B=20, TB=8) to exercise
    # pipelined tiling + row masking + partial-sum finalize.
    batch2, num_classes2 = 20, 32
    k3, k4 = jax.random.split(k2)
    logits2 = jax.random.normal(k3, (batch2, num_classes2), dtype=jnp.float32)
    labels2 = jax.random.randint(k4, (batch2,), 0, num_classes2, dtype=jnp.int32)

    loss2 = cross_entropy_label_smooth(logits2, labels2, num_classes2,
                                       epsilon=0.1, tile_b=8)
    loss2 = jax.block_until_ready(loss2)
    ref2 = _reference(logits2, labels2, num_classes2, epsilon=0.1)
    assert jnp.allclose(loss2, ref2, atol=1e-5, rtol=1e-5), (loss2, ref2)

    print("KERNEL_OK")
</pallas_src>

<mosaic_0001>
module attributes {stable_mosaic.version = 11 : i64} {
  func.func @_ce_label_smooth_kernel(%arg0: i32, %arg1: memref<8x16xf32, #tpu.memory_space<vmem>>, %arg2: memref<8x1xi32, #tpu.memory_space<vmem>>, %arg3: memref<1x1xf32, #tpu.memory_space<smem>>) attributes {dimension_semantics = [#tpu.dimension_semantics<parallel>], iteration_bounds = array<i64: 1>, scalar_prefetch = 0 : i64, scratch_operands = 0 : i64, tpu.core_type = #tpu.core_type<tc>, window_params = [{transform_indices = @transform_0, window_bounds = array<i64: 8, 16>}, {transform_indices = @transform_1, window_bounds = array<i64: 8, 1>}, {transform_indices = @transform_2, window_bounds = array<i64: 1, 1>}]} {
    %c0 = arith.constant 0 : index
    %c0_0 = arith.constant 0 : index
    %0 = vector.load %arg1[%c0, %c0_0] : memref<8x16xf32, #tpu.memory_space<vmem>>, vector<8x16xf32>
    %c0_1 = arith.constant 0 : index
    %c0_2 = arith.constant 0 : index
    %1 = vector.load %arg2[%c0_1, %c0_2] : memref<8x1xi32, #tpu.memory_space<vmem>>, vector<8x1xi32>
    %cst = arith.constant dense<0xFF800000> : vector<8xf32>
    %2 = vector.multi_reduction <maximumf>, %0, %cst [1] : vector<8x16xf32> to vector<8xf32>
    %3 = vector.shape_cast %2 : vector<8xf32> to vector<8x1xf32>
    %4 = vector.broadcast %3 : vector<8x1xf32> to vector<8x16xf32>
    %5 = arith.subf %0, %4 : vector<8x16xf32>
    %6 = math.exp %5 : vector<8x16xf32>
    %cst_3 = arith.constant dense<0.000000e+00> : vector<8xf32>
    %7 = vector.multi_reduction <add>, %6, %cst_3 [1] : vector<8x16xf32> to vector<8xf32>
    %8 = vector.shape_cast %7 : vector<8xf32> to vector<8x1xf32>
    %9 = math.log %8 : vector<8x1xf32>
    %10 = arith.addf %3, %9 : vector<8x1xf32>
    %cst_4 = arith.constant dense<0.000000e+00> : vector<8xf32>
    %11 = vector.multi_reduction <add>, %0, %cst_4 [1] : vector<8x16xf32> to vector<8xf32>
    %12 = vector.shape_cast %11 : vector<8xf32> to vector<8x1xf32>
    %13 = tpu.iota {dimensions = array<i32: 1>} : vector<8x16xi32>
    %14 = vector.broadcast %1 : vector<8x1xi32> to vector<8x16xi32>
    %15 = arith.cmpi eq, %13, %14 : vector<8x16xi32>
    %cst_5 = arith.constant 0.000000e+00 : f32
    %16 = vector.broadcast %cst_5 : f32 to vector<8x16xf32>
    %17 = arith.select %15, %0, %16 : vector<8x16xi1>, vector<8x16xf32>
    %cst_6 = arith.constant dense<0.000000e+00> : vector<8xf32>
    %18 = vector.multi_reduction <add>, %17, %cst_6 [1] : vector<8x16xf32> to vector<8xf32>
    %19 = vector.shape_cast %18 : vector<8xf32> to vector<8x1xf32>
    %20 = arith.subf %10, %19 : vector<8x1xf32>
    %cst_7 = arith.constant 0.899999976 : f32
    %21 = vector.broadcast %cst_7 : f32 to vector<8x1xf32>
    %22 = arith.mulf %21, %20 : vector<8x1xf32>
    %cst_8 = arith.constant 1.600000e+01 : f32
    %23 = vector.broadcast %cst_8 : f32 to vector<8x1xf32>
    %24 = arith.mulf %23, %10 : vector<8x1xf32>
    %25 = arith.subf %24, %12 : vector<8x1xf32>
    %cst_9 = arith.constant 6.250000e-03 : f32
    %26 = vector.broadcast %cst_9 : f32 to vector<8x1xf32>
    %27 = arith.mulf %26, %25 : vector<8x1xf32>
    %28 = arith.addf %22, %27 : vector<8x1xf32>
    %29 = tpu.iota {dimensions = array<i32: 0>} : vector<8x1xi32>
    %c8_i32 = arith.constant 8 : i32
    %30 = arith.muli %arg0, %c8_i32 : i32
    %31 = vector.broadcast %30 : i32 to vector<8x1xi32>
    %32 = arith.addi %29, %31 : vector<8x1xi32>
    %c8_i32_10 = arith.constant 8 : i32
    %33 = vector.broadcast %c8_i32_10 : i32 to vector<8x1xi32>
    %34 = arith.cmpi slt, %32, %33 : vector<8x1xi32>
    %cst_11 = arith.constant 0.000000e+00 : f32
    %35 = vector.broadcast %cst_11 : f32 to vector<8x1xf32>
    %36 = arith.select %34, %28, %35 : vector<8x1xi1>, vector<8x1xf32>
    %37 = vector.shape_cast %36 : vector<8x1xf32> to vector<1x8x1xf32>
    %cst_12 = arith.constant dense<0.000000e+00> : vector<1xf32>
    %38 = vector.multi_reduction <add>, %37, %cst_12 [1, 2] : vector<1x8x1xf32> to vector<1xf32>
    %39 = vector.shape_cast %38 : vector<1xf32> to vector<1x1x1xf32>
    %40 = vector.extract %39[0, 0, 0] : f32 from vector<1x1x1xf32>
    %c0_13 = arith.constant 0 : index
    %c0_14 = arith.constant 0 : index
    %41 = memref.load %arg3[%c0_13, %c0_14] : memref<1x1xf32, #tpu.memory_space<smem>>
    memref.store %40, %arg3[%c0_13, %c0_14] : memref<1x1xf32, #tpu.memory_space<smem>>
    return
  }
  func.func @transform_0(%arg0: i32) -> (i32, i32) {
    %c0_i32 = arith.constant 0 : i32
    %c0_i32_0 = arith.constant 0 : i32
    return %arg0, %c0_i32 : i32, i32
  }
  func.func @transform_1(%arg0: i32) -> (i32, i32) {
    %c0_i32 = arith.constant 0 : i32
    %c0_i32_0 = arith.constant 0 : i32
    return %arg0, %c0_i32 : i32, i32
  }
  func.func @transform_2(%arg0: i32) -> (i32, i32) {
    %c0_i32 = arith.constant 0 : i32
    %c0_i32_0 = arith.constant 0 : i32
    return %arg0, %c0_i32 : i32, i32
  }
}

</mosaic_0001>

<llo_original>
// kernel: tpu_custom_call.1
$region0: #{tpu_custom_call.1}
  #allocation0 [shape = 'u32[]', space=smem, size = 0x4, offset = 0x4, fixed_abs, tag = 'smem constant byte address 0x4 - core index']
  #allocation1 [shape = 'u32[144,128]{1,0:T(1,128)}', space=vmem, size = 0x12000, scoped, tag = 'internal scratch']
  %s0 = inlined_call_operand.vmem [shape: f32[8,16], index: 0, kind: input, shape index: {}]
  %s1 = inlined_call_operand.vmem [shape: s32[8,1], index: 1, kind: input, shape index: {}]
  %s2 = inlined_call_operand.hbm [shape: f32[1,1], index: 2, kind: output, shape index: {}]
  %s3 = sld [smem:[#allocation0]]
  $region18: #{tpu_custom_call.1} parent=0
    _
  %s5 = ssub.s32 1, %s3
  %s6 = scalar_select 0, %s5, %s3
  $region1: #{tpu_custom_call.1} parent=0
    #allocation2 [shape = 'u8[512]{0}', space=smem, size = 0x200, scoped, tag = 'output window, operand 0, single buffered']
    #allocation3 [shape = 's32[1]{0}', space=sflag, size = 0x4, scoped, tag = 'scoped memory for tpu_custom_call.1']
    %7 = vsyncpa [#allocation3], 0
    // Predicated region
    $region2: #{tpu_custom_call.1} parent=1 // pred_check
      _
    $region3: #{tpu_custom_call.1} parent=1 // pred_check_branch
      %9 = sbr.rel (0) target = $region5
    $region4: #{tpu_custom_call.1} parent=1 // pred_region
      _
    $region5: #{tpu_custom_call.1} parent=1 // pred_fallthru
      _
    // Predicated region
    $region6: #{tpu_custom_call.1} parent=1 // pred_check
      _
    $region7: #{tpu_custom_call.1} parent=1 // pred_check_branch
      %11 = sbr.rel (0) target = $region9
    $region8: #{tpu_custom_call.1} parent=1 // pred_region
      _
    $region9: #{tpu_custom_call.1} parent=1 // pred_fallthru
      _
    %v12 = vld [vmem:[%s0] sm:$0xff]
    %v13 = vld [vmem:[%s1] sm:$0xff]
    %vm14 = vcmask 130048
    %v15 = vsel %vm14, %v12, -inf
    %16 = vmax.xlane.f32.xlu0 %v15
    %v17 = vpop.xlane.xlu0 %16
    %v18 = vsub.f32 %v12, %v17
    %v19 = vmul.f32 %v18, 1.442695
    %v20 = vpow.pop %v19
    %v21 = vsel %vm14, %v20, 0.0
    %22 = vadd.xlane.f32.xlu0 %v21
    %v23 = vpop.xlane.xlu0 %22
    %v24 = vlog2.pop %v23
    %v25 = vmul.f32 %v24, 0.6931472
    %v26 = vadd.f32 %v17, %v25
    %v27 = vsel %vm14, %v12, 0.0
    %28 = vadd.xlane.f32.xlu0 %v27
    %v29 = vpop.xlane.xlu0 %28
    %v30 = vlaneseq
    %v31 = vand.u32 %v30, 127
    %32 = vset.pattern.permute.xlu0 0
    %33 = vperm.xlu0 %32, %v13
    %v34 = vpop.permute.xlu0 %33
    %vm35 = vcmp.eq.s32.totalorder %v31, %v34
    %v36 = vsel %vm35, %v12, 0.0
    %v37 = vsel %vm14, %v36, 0.0
    %38 = vadd.xlane.f32.xlu0 %v37
    %v39 = vpop.xlane.xlu0 %38
    %v40 = vsub.f32 %v26, %v39
    %v41 = vmul.f32 %v40, 0.9
    %v42 = vmul.f32 %v26, 16.0
    %v43 = vsub.f32 %v42, %v29
    %v44 = vmul.f32 %v43, 0.00625
    %v45 = vadd.f32 %v41, %v44
    %v46 = vlaneseq
    %v47 = vshrl.u32 %v46, 7
    %s48 = smul.u32 0, 8
    %v49 = vstv %s48
    %v50 = vadd.s32 %v47, %v49
    %vm51 = vcmp.lt.s32.totalorder %v50, 8
    %v52 = vsel %vm51, %v45, 0.0
    %vm53 = vcmask 7168
    %v54 = vsel %vm53, %v52, 0.0
    %55 = vadd.xlane.f32.xlu0 %v54
    %v56 = vpop.xlane.xlu0 %55
    %v57 = vrot.slane %v56, 4
    %v58 = vadd.f32 %v56, %v57
    %v59 = vrot.slane %v58, 2
    %v60 = vadd.f32 %v58, %v59
    %v61 = vrot.slane %v60, 1
    %v62 = vadd.f32 %v60, %v61
    %s63 = vtos %v62
    %s64 = scalar_lea.smem [#allocation2], 0
    %65 = sst [smem:[%s64]] %s63
    // Predicated region
    $region10: #{tpu_custom_call.1} parent=1 // pred_check
      _
    $region11: #{tpu_custom_call.1} parent=1 // pred_check_branch
      %67 = sbr.rel (0) target = $region13
    $region12: #{tpu_custom_call.1} parent=1 // pred_region
      %s69 = ssub.s32 16, 16
      %70 = vsyncadd [#allocation3], %s69
      %73 = dma.smem_to_hbm [#allocation2], 16, %s2, [#allocation3]
    $region13: #{tpu_custom_call.1} parent=1 // pred_fallthru
      _
    // Predicated region
    $region14: #{tpu_custom_call.1} parent=1 // pred_check
      _
    $region15: #{tpu_custom_call.1} parent=1 // pred_check_branch
      %75 = sbr.rel (0) target = $region17
    $region16: #{tpu_custom_call.1} parent=1 // pred_region
      %76 = dma.done [#allocation3], 16
    $region17: #{tpu_custom_call.1} parent=1 // pred_fallthru
      _
    %77 = sfence
    %78 = vsyncpa [#allocation3], 1

</llo_original>
